<compile_context>
chip_gen: v7x
topology: tpu7x:2x2x1
jax: 0.10.0
libtpu: 0.0.40
codegen_flags: <defaults>
</compile_context>

<pallas_src>
import functools

import jax
import jax.numpy as jnp
from jax.experimental import pallas as pl
from jax.experimental.pallas import tpu as pltpu


def _poly1_kernel(logits_ref, labels_ref, *rest, epsilon, n_total, tn,
                  tiles_per_partial, first_masked_tile, needs_mask,
                  has_weight):
    if has_weight:
        w_ref, out_ref, acc_ref = rest
    else:
        out_ref, acc_ref = rest

    p_id = pl.program_id(0)   # partial (TensorCore) index        -- "parallel"
    t_id = pl.program_id(1)   # row-tile index within the partial -- "arbitrary"

    logits = logits_ref[...].astype(jnp.float32)      # [TN, C]
    labels = labels_ref[...]                          # [TN, 1] int32
    n_rows, n_cls = logits.shape

    # one_hot(labels) selection mask via lane-index comparison.
    class_ids = jax.lax.broadcasted_iota(jnp.int32, (n_rows, n_cls), 1)
    is_true = class_ids == labels                     # [TN, C] bool

    # Numerically-stable log-softmax pieces; no explicit softmax / [N,C] divide.
    m = jnp.max(logits, axis=-1, keepdims=True)                       # [TN, 1]
    shifted = logits - m                                              # [TN, C]
    lse = jnp.log(jnp.sum(jnp.exp(shifted), axis=-1, keepdims=True))  # [TN, 1]
    true_logit = jnp.sum(jnp.where(is_true, shifted, 0.0),
                         axis=-1, keepdims=True)                      # [TN, 1]
    log_pt = true_logit - lse                                         # [TN, 1]
    pt = jnp.exp(log_pt)                              # [TN, 1]  (EUP exp, cheap)

    if has_weight:
        # Grid-constant [1, C] class weights; gather per-row weight by reusing
        # the one-hot mask (one extra where + lane-sum; XLU has slack).
        w_vec = w_ref[...].astype(jnp.float32)                        # [1, C]
        w = jnp.sum(jnp.where(is_true, w_vec, 0.0),
                    axis=-1, keepdims=True)                           # [TN, 1]
        ce = -w * log_pt
    else:
        ce = -log_pt

    poly1 = ce + epsilon * (1.0 - pt)                 # [TN, 1]

    @pl.when(t_id == 0)
    def _():
        acc_ref[...] = jnp.zeros_like(acc_ref)

    if needs_mask:
        # Only tiles with global index >= first_masked_tile can contain padded
        # rows (including the clamped phantom tail tile of the 2nd partial).
        global_tile = p_id * tiles_per_partial + t_id
        is_edge = global_tile >= first_masked_tile

        @pl.when(is_edge)
        def _():
            row_start = global_tile * tn
            rows = row_start + jax.lax.broadcasted_iota(
                jnp.int32, (n_rows, 1), 0)
            acc_ref[...] += jnp.where(rows < n_total, poly1, 0.0)

        @pl.when(jnp.logical_not(is_edge))
        def _():
            acc_ref[...] += poly1
    else:
        acc_ref[...] += poly1

    @pl.when(t_id == tiles_per_partial - 1)
    def _():
        # Single cross-sublane reduce per partial; lane-dense (1, 8, 128)
        # output slab, wrapper reads element [p, 0, 0].
        out_ref[...] = jnp.full(out_ref.shape, jnp.sum(acc_ref[...]),
                                dtype=jnp.float32)


def _round_up(x, m):
    return ((x + m - 1) // m) * m


def _tpu_device_kind():
    try:
        return jax.devices()[0].device_kind.lower()
    except Exception:
        return ""


def poly1_cross_entropy_loss(logits, labels, weight=None, epsilon=1.0,
                             reduction="mean", block_rows=None,
                             num_partials=None):
    """Poly-1 cross-entropy.  logits: [N, C], labels: [N] int, weight: [C]."""
    if reduction not in ("mean", "sum"):
        # TODO(synk): reduction='none' needs an [N]-shaped (non-reduced) output
        # path; only the scalar reductions used by ST-track are implemented.
        raise NotImplementedError(f"reduction={reduction!r} is not supported")

    n, c = logits.shape
    labels_2d = labels.astype(jnp.int32).reshape(n, 1)
    has_weight = weight is not None

    # ---- Generation-aware VMEM budget ---------------------------------------
    kind = _tpu_device_kind()
    is_v7 = "v7" in kind
    known_single_core = ("v5" in kind) or ("v6" in kind) or ("v4" in kind)
    if is_v7 or not kind:
        # v7x: 64 MiB physical / 32 MiB scoped VMEM per TC (and the default
        # for unknown parts, to stay safe).
        per_buffer_bytes = 6 * 1024 * 1024
        vmem_limit = 32 * 1024 * 1024
    else:
        # v5e / v6e: 128 MiB VMEM — use it.
        per_buffer_bytes = 20 * 1024 * 1024
        vmem_limit = 96 * 1024 * 1024

    # ---- Tile sizing ---------------------------------------------------------
    itemsize = jnp.dtype(logits.dtype).itemsize
    row_bytes = max(c * itemsize, 1)
    tn = min(8192, per_buffer_bytes // row_bytes, _round_up(n, 8))
    if block_rows is not None:
        tn = min(int(block_rows), _round_up(n, 8))
    align = 32 if tn >= 32 else 8
    tn = max(8, (tn // align) * align)

    total_tiles = pl.cdiv(n, tn)

    # Partial split: 2 independent partial sums on dual-TensorCore parts
    # (v7x) so the leading "parallel" axis shards across both cores, even when
    # the tile count is odd (phantom tail tile is clamped + masked).
    if num_partials is None:
        num_partials = 2 if (total_tiles >= 2 and not known_single_core) else 1
    num_partials = max(1, min(int(num_partials), total_tiles))
    tiles_per_partial = pl.cdiv(total_tiles, num_partials)
    padded_rows = num_partials * tiles_per_partial * tn
    needs_mask = padded_rows != n
    first_masked_tile = n // tn

    kernel = functools.partial(
        _poly1_kernel,
        epsilon=float(epsilon),
        n_total=n,
        tn=tn,
        tiles_per_partial=tiles_per_partial,
        first_masked_tile=first_masked_tile,
        needs_mask=needs_mask,
        has_weight=has_weight,
    )

    def _row_map(p, t):
        idx = p * tiles_per_partial + t
        # Clamp phantom tail tiles onto the last real tile; their rows are
        # >= n and get masked away inside the kernel.
        return (jnp.minimum(idx, total_tiles - 1), 0)

    in_specs = [
        pl.BlockSpec((tn, c), _row_map),   # logits (dtype passthrough)
        pl.BlockSpec((tn, 1), _row_map),   # labels
    ]
    args = [logits, labels_2d]
    weight_bytes = 0
    if has_weight:
        in_specs.append(pl.BlockSpec((1, c), lambda p, t: (0, 0)))  # [1,C] const
        args.append(weight.astype(jnp.float32).reshape(1, c))
        weight_bytes = c * 4

    cost = pl.CostEstimate(
        flops=8 * n * c,
        transcendentals=n * c + 2 * n,
        bytes_accessed=(n * c * itemsize + n * 4 + weight_bytes
                        + num_partials * 8 * 128 * 4),
    )

    out = pl.pallas_call(
        kernel,
        out_shape=jax.ShapeDtypeStruct((num_partials, 8, 128), jnp.float32),
        grid_spec=pltpu.PrefetchScalarGridSpec(
            num_scalar_prefetch=0,
            grid=(num_partials, tiles_per_partial),
            in_specs=in_specs,
            out_specs=pl.BlockSpec((1, 8, 128), lambda p, t: (p, 0, 0)),
            scratch_shapes=[pltpu.VMEM((tn, 1), jnp.float32)],
        ),
        compiler_params=pltpu.CompilerParams(
            dimension_semantics=("parallel", "arbitrary"),
            vmem_limit_bytes=vmem_limit,
        ),
        cost_estimate=cost,
    )(*args)

    total = jnp.sum(out[:, 0, 0])
    if reduction == "mean":
        # Module semantics: CE(reduction='none', weight=) then .mean(), i.e.
        # divide by N (NOT by the sum of target weights as F.cross_entropy
        # with reduction='mean' would).
        return total * (1.0 / n)
    return total


def _reference(logits, labels, weight, epsilon, reduction="mean"):
    # Pure-JAX reference mirroring the PyTorch forward.
    c = logits.shape[-1]
    logits_f32 = logits.astype(jnp.float32)
    onehot = jax.nn.one_hot(labels, c, dtype=jnp.float32)
    sm = jax.nn.softmax(logits_f32, axis=-1)
    pt = jnp.sum(onehot * sm, axis=-1)
    log_sm = jax.nn.log_softmax(logits_f32, axis=-1)
    w = jnp.ones((c,), jnp.float32) if weight is None else weight.astype(jnp.float32)
    ce = -w[labels] * jnp.sum(onehot * log_sm, axis=-1)
    poly1 = ce + epsilon * (1.0 - pt)
    if reduction == "mean":
        return poly1.mean()
    return poly1.sum()


if __name__ == "__main__":
    key = jax.random.PRNGKey(0)
    N, C = 16, 8          # small: N samples, C = num_classes
    k1, k2 = jax.random.split(key)
    logits = jax.random.normal(k1, (N, C), dtype=jnp.float32)
    labels = jax.random.randint(k2, (N,), 0, C, dtype=jnp.int32)
    weight = jnp.linspace(0.5, 1.5, C, dtype=jnp.float32)

    out = poly1_cross_entropy_loss(logits, labels, weight=weight,
                                   epsilon=1.0, reduction="mean")
    out = jax.block_until_ready(out)
    ref = _reference(logits, labels, weight, 1.0, "mean")
    assert jnp.allclose(out, ref, atol=1e-5, rtol=1e-5), (out, ref)

    # Exercise the tiled path: forced small tiles, 2 partials with an odd tile
    # count (phantom clamped tail tile) and a masked partial last tile.
    N2 = 2000
    k3, k4 = jax.random.split(k2)
    logits2 = jax.random.normal(k3, (N2, C), dtype=jnp.float32)
    labels2 = jax.random.randint(k4, (N2,), 0, C, dtype=jnp.int32)
    out2 = poly1_cross_entropy_loss(logits2, labels2, weight=None,
                                    epsilon=2.0, reduction="mean",
                                    block_rows=288, num_partials=2)
    out2 = jax.block_until_ready(out2)
    ref2 = _reference(logits2, labels2, None, 2.0, "mean")
    assert jnp.allclose(out2, ref2, atol=1e-4, rtol=1e-4), (out2, ref2)

    # bf16 logits, weighted, reduction='sum', single big tile (default path).
    N3 = 512
    k5, k6 = jax.random.split(k4)
    logits3 = jax.random.normal(k5, (N3, C), dtype=jnp.bfloat16)
    labels3 = jax.random.randint(k6, (N3,), 0, C, dtype=jnp.int32)
    out3 = poly1_cross_entropy_loss(logits3, labels3, weight=weight,
                                    epsilon=0.5, reduction="sum")
    out3 = jax.block_until_ready(out3)
    ref3 = _reference(logits3, labels3, weight, 0.5, "sum")
    assert jnp.allclose(out3, ref3, atol=1e-2, rtol=1e-4), (out3, ref3)

    print("KERNEL_OK")
</pallas_src>

<mosaic_0001>
module attributes {stable_mosaic.version = 11 : i64} {
  func.func @_poly1_kernel(%arg0: i32, %arg1: i32, %arg2: memref<16x8xf32, #tpu.memory_space<vmem>>, %arg3: memref<16x1xi32, #tpu.memory_space<vmem>>, %arg4: memref<1x8xf32, #tpu.memory_space<vmem>>, %arg5: memref<1x8x128xf32, #tpu.memory_space<vmem>>, %arg6: memref<16x1xf32, #tpu.memory_space<vmem>>) attributes {dimension_semantics = [#tpu.dimension_semantics<parallel>, #tpu.dimension_semantics<arbitrary>], iteration_bounds = array<i64: 1, 1>, scalar_prefetch = 0 : i64, scratch_operands = 1 : i64, tpu.core_type = #tpu.core_type<tc>, window_params = [{transform_indices = @transform_0, window_bounds = array<i64: 16, 8>}, {transform_indices = @transform_1, window_bounds = array<i64: 16, 1>}, {pipeline_mode = #tpu.pipeline_mode<synchronous>, transform_indices = @transform_2, window_bounds = array<i64: 1, 8>}, {transform_indices = @transform_3, window_bounds = array<i64: 1, 8, 128>}]} {
    %c0 = arith.constant 0 : index
    %c0_0 = arith.constant 0 : index
    %0 = vector.load %arg2[%c0, %c0_0] : memref<16x8xf32, #tpu.memory_space<vmem>>, vector<16x8xf32>
    %c0_1 = arith.constant 0 : index
    %c0_2 = arith.constant 0 : index
    %1 = vector.load %arg3[%c0_1, %c0_2] : memref<16x1xi32, #tpu.memory_space<vmem>>, vector<16x1xi32>
    %2 = tpu.iota {dimensions = array<i32: 1>} : vector<16x8xi32>
    %3 = vector.broadcast %1 : vector<16x1xi32> to vector<16x8xi32>
    %4 = arith.cmpi eq, %2, %3 : vector<16x8xi32>
    %cst = arith.constant dense<0xFF800000> : vector<16xf32>
    %5 = vector.multi_reduction <maximumf>, %0, %cst [1] : vector<16x8xf32> to vector<16xf32>
    %6 = vector.shape_cast %5 : vector<16xf32> to vector<16x1xf32>
    %7 = vector.broadcast %6 : vector<16x1xf32> to vector<16x8xf32>
    %8 = arith.subf %0, %7 : vector<16x8xf32>
    %9 = math.exp %8 : vector<16x8xf32>
    %cst_3 = arith.constant dense<0.000000e+00> : vector<16xf32>
    %10 = vector.multi_reduction <add>, %9, %cst_3 [1] : vector<16x8xf32> to vector<16xf32>
    %11 = vector.shape_cast %10 : vector<16xf32> to vector<16x1xf32>
    %12 = math.log %11 : vector<16x1xf32>
    %cst_4 = arith.constant 0.000000e+00 : f32
    %13 = vector.broadcast %cst_4 : f32 to vector<16x8xf32>
    %14 = arith.select %4, %8, %13 : vector<16x8xi1>, vector<16x8xf32>
    %cst_5 = arith.constant dense<0.000000e+00> : vector<16xf32>
    %15 = vector.multi_reduction <add>, %14, %cst_5 [1] : vector<16x8xf32> to vector<16xf32>
    %16 = vector.shape_cast %15 : vector<16xf32> to vector<16x1xf32>
    %17 = arith.subf %16, %12 : vector<16x1xf32>
    %18 = math.exp %17 : vector<16x1xf32>
    %c0_6 = arith.constant 0 : index
    %c0_7 = arith.constant 0 : index
    %19 = vector.load %arg4[%c0_6, %c0_7] : memref<1x8xf32, #tpu.memory_space<vmem>>, vector<1x8xf32>
    %cst_8 = arith.constant 0.000000e+00 : f32
    %20 = vector.shape_cast %19 : vector<1x8xf32> to vector<1x8xf32>
    %21 = vector.broadcast %20 : vector<1x8xf32> to vector<16x8xf32>
    %22 = vector.broadcast %cst_8 : f32 to vector<16x8xf32>
    %23 = arith.select %4, %21, %22 : vector<16x8xi1>, vector<16x8xf32>
    %cst_9 = arith.constant dense<0.000000e+00> : vector<16xf32>
    %24 = vector.multi_reduction <add>, %23, %cst_9 [1] : vector<16x8xf32> to vector<16xf32>
    %25 = vector.shape_cast %24 : vector<16xf32> to vector<16x1xf32>
    %cst_10 = arith.constant 0.000000e+00 : f32
    %26 = vector.broadcast %cst_10 : f32 to vector<16x1xf32>
    %27 = arith.subf %26, %25 : vector<16x1xf32>
    %28 = arith.mulf %27, %17 : vector<16x1xf32>
    %cst_11 = arith.constant 1.000000e+00 : f32
    %29 = vector.broadcast %cst_11 : f32 to vector<16x1xf32>
    %30 = arith.subf %29, %18 : vector<16x1xf32>
    %cst_12 = arith.constant 1.000000e+00 : f32
    %31 = vector.broadcast %cst_12 : f32 to vector<16x1xf32>
    %32 = arith.mulf %31, %30 : vector<16x1xf32>
    %33 = arith.addf %28, %32 : vector<16x1xf32>
    %c0_i32 = arith.constant 0 : i32
    %34 = arith.cmpi eq, %arg1, %c0_i32 : i32
    %35 = arith.extui %34 : i1 to i32
    %c0_i32_13 = arith.constant 0 : i32
    %36 = arith.cmpi ne, %35, %c0_i32_13 : i32
    scf.if %36 {
      %cst_20 = arith.constant 0.000000e+00 : f32
      %43 = vector.broadcast %cst_20 : f32 to vector<16x1xf32>
      %c0_21 = arith.constant 0 : index
      %c0_22 = arith.constant 0 : index
      %44 = vector.load %arg6[%c0_21, %c0_22] : memref<16x1xf32, #tpu.memory_space<vmem>>, vector<16x1xf32>
      tpu.vector_store %arg6[%c0_21, %c0_22], %43 {strides = array<i32>} : memref<16x1xf32, #tpu.memory_space<vmem>>, vector<16x1xf32>,
    } else {
    }
    %c0_14 = arith.constant 0 : index
    %c0_15 = arith.constant 0 : index
    %37 = vector.load %arg6[%c0_14, %c0_15] : memref<16x1xf32, #tpu.memory_space<vmem>>, vector<16x1xf32>
    %38 = arith.addf %37, %33 : vector<16x1xf32>
    %c0_16 = arith.constant 0 : index
    %c0_17 = arith.constant 0 : index
    %39 = vector.load %arg6[%c0_16, %c0_17] : memref<16x1xf32, #tpu.memory_space<vmem>>, vector<16x1xf32>
    tpu.vector_store %arg6[%c0_16, %c0_17], %38 {strides = array<i32>} : memref<16x1xf32, #tpu.memory_space<vmem>>, vector<16x1xf32>,
    %c0_i32_18 = arith.constant 0 : i32
    %40 = arith.cmpi eq, %arg1, %c0_i32_18 : i32
    %41 = arith.extui %40 : i1 to i32
    %c0_i32_19 = arith.constant 0 : i32
    %42 = arith.cmpi ne, %41, %c0_i32_19 : i32
    scf.if %42 {
      %c0_20 = arith.constant 0 : index
      %c0_21 = arith.constant 0 : index
      %43 = vector.load %arg6[%c0_20, %c0_21] : memref<16x1xf32, #tpu.memory_space<vmem>>, vector<16x1xf32>
      %44 = vector.shape_cast %43 : vector<16x1xf32> to vector<1x16x1xf32>
      %cst_22 = arith.constant dense<0.000000e+00> : vector<1xf32>
      %45 = vector.multi_reduction <add>, %44, %cst_22 [1, 2] : vector<1x16x1xf32> to vector<1xf32>
      %46 = vector.shape_cast %45 : vector<1xf32> to vector<1x1x1xf32>
      %47 = vector.extract %46[0, 0, 0] : f32 from vector<1x1x1xf32>
      %48 = vector.broadcast %47 : f32 to vector<1x8x128xf32>
      %c0_23 = arith.constant 0 : index
      %c0_24 = arith.constant 0 : index
      %c0_25 = arith.constant 0 : index
      %49 = vector.load %arg5[%c0_23, %c0_24, %c0_25] : memref<1x8x128xf32, #tpu.memory_space<vmem>>, vector<1x8x128xf32>
      tpu.vector_store %arg5[%c0_23, %c0_24, %c0_25], %48 {strides = array<i32>} : memref<1x8x128xf32, #tpu.memory_space<vmem>>, vector<1x8x128xf32>,
    } else {
    }
    return
  }
  func.func @transform_0(%arg0: i32, %arg1: i32) -> (i32, i32) {
    %c1_i32 = arith.constant 1 : i32
    %0 = arith.muli %arg0, %c1_i32 : i32
    %1 = arith.addi %0, %arg1 : i32
    %c0_i32 = arith.constant 0 : i32
    %2 = arith.minsi %1, %c0_i32 : i32
    %c0_i32_0 = arith.constant 0 : i32
    %c0_i32_1 = arith.constant 0 : i32
    return %2, %c0_i32_0 : i32, i32
  }
  func.func @transform_1(%arg0: i32, %arg1: i32) -> (i32, i32) {
    %c1_i32 = arith.constant 1 : i32
    %0 = arith.muli %arg0, %c1_i32 : i32
    %1 = arith.addi %0, %arg1 : i32
    %c0_i32 = arith.constant 0 : i32
    %2 = arith.minsi %1, %c0_i32 : i32
    %c0_i32_0 = arith.constant 0 : i32
    %c0_i32_1 = arith.constant 0 : i32
    return %2, %c0_i32_0 : i32, i32
  }
  func.func @transform_2(%arg0: i32, %arg1: i32) -> (i32, i32) {
    %c0_i32 = arith.constant 0 : i32
    %c0_i32_0 = arith.constant 0 : i32
    %c0_i32_1 = arith.constant 0 : i32
    return %c0_i32, %c0_i32_0 : i32, i32
  }
  func.func @transform_3(%arg0: i32, %arg1: i32) -> (i32, i32, i32) {
    %c0_i32 = arith.constant 0 : i32
    %c0_i32_0 = arith.constant 0 : i32
    %c0_i32_1 = arith.constant 0 : i32
    return %arg0, %c0_i32, %c0_i32_0 : i32, i32, i32
  }
}

</mosaic_0001>

<llo_original>
// kernel: tpu_custom_call.1
$region0: #{tpu_custom_call.1}
  #allocation0 [shape = 'u32[]', space=smem, size = 0x4, offset = 0x4, fixed_abs, tag = 'smem constant byte address 0x4 - core index']
  #allocation1 [shape = 'u32[144,128]{1,0:T(1,128)}', space=vmem, size = 0x12000, scoped, tag = 'internal scratch']
  #allocation2 [shape = 'f32[16,1]{1,0:T(8,128)}', space=vmem, size = 0x2000, scoped, tag = 'scratch operand']
  %s0 = inlined_call_operand.hbm [shape: f32[16,8], index: 0, kind: input, shape index: {}]
  %s1 = inlined_call_operand.hbm [shape: s32[16,1], index: 1, kind: input, shape index: {}]
  %s2 = inlined_call_operand.hbm [shape: f32[1,8], index: 2, kind: input, shape index: {}]
  %s3 = inlined_call_operand.hbm [shape: f32[1,8,128], index: 3, kind: output, shape index: {}]
  %s4 = sld [smem:[#allocation0]]
  $region42: #{tpu_custom_call.1} parent=0
    _
  %s6 = ssub.s32 1, %s4
  %s7 = scalar_select 0, %s6, %s4
  $region1: #{tpu_custom_call.1} parent=0
    #allocation3 [shape = 'u8[8192]{0}', space=vmem, size = 0x2000, scoped, tag = 'input window, operand 0, single buffered']
    #allocation4 [shape = 's32[1]{0}', space=sflag, size = 0x4, scoped, tag = 'scoped memory for tpu_custom_call.1']
    #allocation5 [shape = 's32[1]{0}', space=sflag, size = 0x4, scoped, tag = 'scoped memory for tpu_custom_call.1']
    #allocation6 [shape = 'u8[8192]{0}', space=vmem, size = 0x2000, scoped, tag = 'input window, operand 1, single buffered']
    #allocation7 [shape = 's32[1]{0}', space=sflag, size = 0x4, scoped, tag = 'scoped memory for tpu_custom_call.1']
    #allocation8 [shape = 'u8[512]{0}', space=vmem, size = 0x400, scoped, tag = 'input window, operand 2, single buffered']
    #allocation9 [shape = 'u8[4096]{0}', space=vmem, size = 0x1000, scoped, tag = 'output window, operand 0, single buffered']
    %8 = vsyncpa [#allocation4], 0
    %9 = vsyncpa [#allocation7], 0
    %10 = vsyncpa [#allocation5], 0
    // Predicated region
    $region2: #{tpu_custom_call.1} parent=1 // pred_check
      _
    $region3: #{tpu_custom_call.1} parent=1 // pred_check_branch
      %12 = sbr.rel (0) target = $region5
    $region4: #{tpu_custom_call.1} parent=1 // pred_region
      %s13 = sadd.s32 0, 0
      %p14 = scmp.lt.s32.totalorder %s13, 0
      %s15 = scalar_select %p14, %s13, 0
      %s16 = smul.u32 2, %s15
      %s18 = ssub.s32 256, 256
      %19 = vsyncadd [#allocation4], %s18
      %s20 = smul.addr %s16, 128
      %s21 = scalar_lea.hbm %s0, %s20
      %s22 = sshll.u32 [#allocation3], 4
      %s23 = int_to_ptr.vmem [resolvable:$true] %s22
      %28 = dma.hbm_to_vmem [thread:$0]  %s21, 256, %s23, [#allocation4], 128, 128, 8
    $region5: #{tpu_custom_call.1} parent=1 // pred_fallthru
      _
    // Predicated region
    $region6: #{tpu_custom_call.1} parent=1 // pred_check
      _
    $region7: #{tpu_custom_call.1} parent=1 // pred_check_branch
      %30 = sbr.rel (0) target = $region9
    $region8: #{tpu_custom_call.1} parent=1 // pred_region
      %s31 = sadd.s32 0, 0
      %p32 = scmp.lt.s32.totalorder %s31, 0
      %s33 = scalar_select %p32, %s31, 0
      %s34 = smul.u32 2, %s33
      %s36 = ssub.s32 256, 256
      %37 = vsyncadd [#allocation7], %s36
      %s38 = smul.addr %s34, 128
      %s39 = scalar_lea.hbm %s1, %s38
      %s40 = sshll.u32 [#allocation6], 4
      %s41 = int_to_ptr.vmem [resolvable:$true] %s40
      %46 = dma.hbm_to_vmem [thread:$0]  %s39, 256, %s41, [#allocation7], 128, 128, 8
    $region9: #{tpu_custom_call.1} parent=1 // pred_fallthru
      _
    // Predicated region
    $region10: #{tpu_custom_call.1} parent=1 // pred_check
      _
    $region11: #{tpu_custom_call.1} parent=1 // pred_check_branch
      %48 = sbr.rel (0) target = $region13
    $region12: #{tpu_custom_call.1} parent=1 // pred_region
      %s50 = ssub.s32 16, 16
      %51 = vsyncadd [#allocation7], %s50
      %s53 = sshll.u32 [#allocation8], 4
      %s54 = int_to_ptr.vmem [resolvable:$true] %s53
      %56 = dma.hbm_to_vmem [thread:$0]  %s2, 16, %s54, [#allocation7]
    $region13: #{tpu_custom_call.1} parent=1 // pred_fallthru
      _
    // Predicated region
    $region14: #{tpu_custom_call.1} parent=1 // pred_check
      _
    $region15: #{tpu_custom_call.1} parent=1 // pred_check_branch
      %58 = sbr.rel (0) target = $region17
    $region16: #{tpu_custom_call.1} parent=1 // pred_region
      %59 = dma.done [#allocation4], 256
    $region17: #{tpu_custom_call.1} parent=1 // pred_fallthru
      _
    // Predicated region
    $region18: #{tpu_custom_call.1} parent=1 // pred_check
      _
    $region19: #{tpu_custom_call.1} parent=1 // pred_check_branch
      %61 = sbr.rel (0) target = $region21
    $region20: #{tpu_custom_call.1} parent=1 // pred_region
      %62 = dma.done [#allocation7], 256
    $region21: #{tpu_custom_call.1} parent=1 // pred_fallthru
      _
    // Predicated region
    $region22: #{tpu_custom_call.1} parent=1 // pred_check
      _
    $region23: #{tpu_custom_call.1} parent=1 // pred_check_branch
      %64 = sbr.rel (0) target = $region25
    $region24: #{tpu_custom_call.1} parent=1 // pred_region
      %65 = dma.done [#allocation7], 16
    $region25: #{tpu_custom_call.1} parent=1 // pred_fallthru
      _
    %s66 = sadd.s32 0, 0
    %p67 = scmp.lt.s32.totalorder %s66, 0
    %s68 = scalar_select %p67, %s66, 0
    %s69 = smul.u32 2, %s68
    %s70 = sadd.s32 0, 0
    %p71 = scmp.lt.s32.totalorder %s70, 0
    %s72 = scalar_select %p71, %s70, 0
    %s73 = smul.u32 2, %s72
    %v74 = vld [vmem:[#allocation3] sm:$0xff]
    %v75 = vld [vmem:[#allocation3 + $0x8] sm:$0xff]
    %v76 = vld [vmem:[#allocation6] sm:$0xff]
    %v77 = vld [vmem:[#allocation6 + $0x8] sm:$0xff]
    %v78 = vlaneseq
    %v79 = vand.u32 %v78, 127
    %80 = vset.pattern.permute.xlu0 0
    %81 = vperm.xlu0 %80, %v76
    %v82 = vpop.permute.xlu0 %81
    %83 = vset.pattern.permute.xlu0 0
    %84 = vperm.xlu0 %83, %v77
    %v85 = vpop.permute.xlu0 %84
    %vm86 = vcmp.eq.s32.totalorder %v79, %v82
    %vm87 = vcmp.eq.s32.totalorder %v79, %v85
    %vm88 = vcmask 64512
    %v89 = vsel %vm88, %v74, -inf
    %90 = vmax.xlane.f32.xlu0 %v89
    %v91 = vpop.xlane.xlu0 %90
    %v92 = vsel %vm88, %v75, -inf
    %93 = vmax.xlane.f32.xlu0 %v92
    %v94 = vpop.xlane.xlu0 %93
    %v95 = vsub.f32 %v74, %v91
    %v96 = vsub.f32 %v75, %v94
    %v97 = vmul.f32 %v95, 1.442695
    %v98 = vpow.pop %v97
    %v99 = vmul.f32 %v96, 1.442695
    %v100 = vpow.pop %v99
    %v101 = vsel %vm88, %v98, 0.0
    %102 = vadd.xlane.f32.xlu0 %v101
    %v103 = vpop.xlane.xlu0 %102
    %v104 = vsel %vm88, %v100, 0.0
    %105 = vadd.xlane.f32.xlu0 %v104
    %v106 = vpop.xlane.xlu0 %105
    %v107 = vlog2.pop %v103
    %v108 = vmul.f32 %v107, 0.6931472
    %v109 = vlog2.pop %v106
    %v110 = vmul.f32 %v109, 0.6931472
    %v111 = vsel %vm86, %v95, 0.0
    %v112 = vsel %vm87, %v96, 0.0
    %v113 = vsel %vm88, %v111, 0.0
    %114 = vadd.xlane.f32.xlu0 %v113
    %v115 = vpop.xlane.xlu0 %114
    %v116 = vsel %vm88, %v112, 0.0
    %117 = vadd.xlane.f32.xlu0 %v116
    %v118 = vpop.xlane.xlu0 %117
    %v119 = vsub.f32 %v115, %v108
    %v120 = vsub.f32 %v118, %v110
    %v121 = vmul.f32 %v119, 1.442695
    %v122 = vpow.pop %v121
    %v123 = vmul.f32 %v120, 1.442695
    %v124 = vpow.pop %v123
    %v125 = vld [vmem:[#allocation8] sm:$0x1]
    %v127 = vlaneseq
    %v128 = vshrl.u32 %v127, 7
    %v129 = vsub.s32 0, %v128
    %v130 = vrot.slane %v125, %v129
    %v132 = vsel %vm86, %v130, 0.0
    %v133 = vsel %vm87, %v130, 0.0
    %v134 = vsel %vm88, %v132, 0.0
    %135 = vadd.xlane.f32.xlu0 %v134
    %v136 = vpop.xlane.xlu0 %135
    %v137 = vsel %vm88, %v133, 0.0
    %138 = vadd.xlane.f32.xlu0 %v137
    %v139 = vpop.xlane.xlu0 %138
    %v140 = vsub.f32 0.0, %v136
    %v141 = vsub.f32 0.0, %v139
    %v142 = vmul.f32 %v140, %v119
    %v143 = vmul.f32 %v141, %v120
    %v144 = vsub.f32 1.0, %v122
    %v145 = vsub.f32 1.0, %v124
    %v146 = vadd.f32 %v142, %v144
    %v147 = vadd.f32 %v143, %v145
    %p148 = scmp.eq.s32.totalorder 0, 0
    // Predicated region
    $region26: #{tpu_custom_call.1} parent=1 // pred_check
      %p149 = pneg %p148
    $region27: #{tpu_custom_call.1} parent=1 // pred_check_branch
      %151 = sbr.rel (%p149) target = $region29
    $region28: #{tpu_custom_call.1} parent=1 // pred_region
      %vm152 = vcmask 7168
      %153 = vst.msk [vmem:[#allocation2] sm:$0xff] %vm152, 0.0
      %154 = vst.msk [vmem:[#allocation2 + $0x8] sm:$0xff] %vm152, 0.0
    $region29: #{tpu_custom_call.1} parent=1 // pred_fallthru
      _
    %v155 = vld [vmem:[#allocation2] sm:$0xff]
    %v156 = vld [vmem:[#allocation2 + $0x8] sm:$0xff]
    %v157 = vadd.f32 %v155, %v146
    %v158 = vadd.f32 %v156, %v147
    %vm159 = vcmask 7168
    %160 = vst.msk [vmem:[#allocation2] sm:$0xff] %vm159, %v157
    %161 = vst.msk [vmem:[#allocation2 + $0x8] sm:$0xff] %vm159, %v158
    // Predicated region
    $region30: #{tpu_custom_call.1} parent=1 // pred_check
      %p162 = pneg %p148
    $region31: #{tpu_custom_call.1} parent=1 // pred_check_branch
      %164 = sbr.rel (%p162) target = $region33
    $region32: #{tpu_custom_call.1} parent=1 // pred_region
      %v165 = vld [vmem:[#allocation2] sm:$0xff]
      %v166 = vld [vmem:[#allocation2 + $0x8] sm:$0xff]
      %v167 = vsel %vm159, %v165, 0.0
      %v168 = vsel %vm159, %v166, 0.0
      %v169 = vadd.f32 %v167, %v168
      %170 = vadd.xlane.f32.xlu0 %v169
      %v171 = vpop.xlane.xlu0 %170
      %v172 = vrot.slane %v171, 4
      %v173 = vadd.f32 %v171, %v172
      %v174 = vrot.slane %v173, 2
      %v175 = vadd.f32 %v173, %v174
      %v176 = vrot.slane %v175, 1
      %v177 = vadd.f32 %v175, %v176
      %s178 = vtos %v177
      %v179 = vstv %s178
      %180 = vst [vmem:[#allocation9] sm:$0xff] %v179
    $region33: #{tpu_custom_call.1} parent=1 // pred_fallthru
      _
    // Predicated region
    $region34: #{tpu_custom_call.1} parent=1 // pred_check
      _
    $region35: #{tpu_custom_call.1} parent=1 // pred_check_branch
      %182 = sbr.rel (0) target = $region37
    $region36: #{tpu_custom_call.1} parent=1 // pred_region
      %s184 = ssub.s32 128, 128
      %185 = vsyncadd [#allocation5], %s184
      %s187 = sshll.u32 [#allocation9], 4
      %s188 = int_to_ptr.vmem [resolvable:$true] %s187
      %190 = dma.vmem_to_hbm [thread:$0]  %s188, 128, %s3, [#allocation5]
    $region37: #{tpu_custom_call.1} parent=1 // pred_fallthru
      _
    // Predicated region
    $region38: #{tpu_custom_call.1} parent=1 // pred_check
      _
    $region39: #{tpu_custom_call.1} parent=1 // pred_check_branch
      %192 = sbr.rel (0) target = $region41
    $region40: #{tpu_custom_call.1} parent=1 // pred_region
      %193 = dma.done [#allocation5], 128
    $region41: #{tpu_custom_call.1} parent=1 // pred_fallthru
      _
    %194 = vsyncpa [#allocation4], 1
    %195 = vsyncpa [#allocation7], 1
    %196 = vsyncpa [#allocation5], 1

</llo_original>
